<compile_context>
chip_gen: v6e
topology: v6e:2x2x1
jax: 0.10.0
libtpu: 0.0.40
codegen_flags: <defaults>
</compile_context>

<pallas_src>
import jax
import jax.numpy as jnp
from jax.experimental import pallas as pl
from jax.experimental.pallas import tpu as pltpu


_LOSS_PAD = (8, 128)                 # lane/sublane-aligned per-tile loss block
_VMEM_BUDGET_BYTES = 24 * 1024 * 1024   # conservative; fits v5e/v6e/v7x scoped VMEM
_VMEM_LIMIT_BYTES = 32 * 1024 * 1024


def _ce_partial_sum(logits, tgt):
    """Sum over the tile of per-token NLL (numerically stable log-softmax)."""
    tn, c = logits.shape
    col = jax.lax.broadcasted_iota(jnp.int32, (tn, c), 1)
    m = jnp.max(logits, axis=-1, keepdims=True)
    lse = jnp.log(jnp.sum(jnp.exp(logits - m), axis=-1, keepdims=True)) + m
    picked = jnp.sum(jnp.where(col == tgt, logits, 0.0), axis=-1, keepdims=True)
    return jnp.sum(lse - picked)


def _gather_rows(idx_smem, table_ref, logits_ref, sem):
    """DMA the tile's tn selected (1, C) embedding rows straight into the
    logits output block.

    `table_ref` is either a VMEM-resident block (fast path: on-chip copies) or
    a raw HBM ref (huge-table fallback); the copies work identically for both.
    All copies share one DMA semaphore: start-all, then wait-all.
    """
    tile = pl.program_id(0)
    tn = logits_ref.shape[0]
    base = tile * tn

    @pl.loop(0, tn)
    def _(r):
        tok = idx_smem[base + r]
        pltpu.make_async_copy(table_ref.at[pl.ds(tok, 1)],
                              logits_ref.at[pl.ds(r, 1)],
                              sem).start()

    @pl.loop(0, tn)
    def _(r):
        # Each wait retires one row's worth of the shared semaphore; after tn
        # waits every row copy has landed.
        pltpu.make_async_copy(table_ref.at[pl.ds(0, 1)],
                              logits_ref.at[pl.ds(0, 1)],
                              sem).wait()


def _bigram_loss_kernel(idx_smem, tgt_ref, table_ref, logits_ref, loss_ref, sem):
    _gather_rows(idx_smem, table_ref, logits_ref, sem)
    partial = _ce_partial_sum(logits_ref[...], tgt_ref[...])
    # Per-tile partial loss, broadcast over a lane-dense (1, 8, 128) block so
    # the grid axis can be "parallel"; the wrapper sums and divides by N.
    loss_ref[...] = jnp.full(loss_ref.shape, partial, jnp.float32)


def _bigram_infer_kernel(idx_smem, table_ref, logits_ref, sem):
    # Inference: embedding lookup only, no cross-entropy work.
    _gather_rows(idx_smem, table_ref, logits_ref, sem)


def _vmem_bytes(tn, V, C, resident):
    item = 4  # f32 / int32
    total = 2 * tn * C * item                       # double-buffered logits tile
    total += 2 * tn * item                          # targets tile
    total += 2 * _LOSS_PAD[0] * _LOSS_PAD[1] * item  # per-tile loss block
    if resident:
        total += 2 * V * C * item                   # resident table (worst case)
    return total


def _plan(N, V, C, tn, force_hbm_gather):
    """Pick (tile size, resident-table?) under the VMEM budget."""
    if tn is not None:
        candidates = [tn]
    else:
        candidates = [c for c in (1024, 512, 256, 128, 64, 32, 16, 8) if N % c == 0]
        if not candidates:
            candidates = [N]
    if not force_hbm_gather:
        for t in candidates:
            if _vmem_bytes(t, V, C, resident=True) <= _VMEM_BUDGET_BYTES:
                return t, True
    for t in candidates:
        if _vmem_bytes(t, V, C, resident=False) <= _VMEM_BUDGET_BYTES:
            return t, False
    return candidates[-1], False


def bigram_forward(idx, targets, table, *, tn=None, force_hbm_gather=False):
    """idx, targets: (B, T) int (targets may be None). table: (V, C) f32.

    Returns (logits (B*T, C), mean_loss) when targets given, else
    (logits (B, T, C), None) -- matching the PyTorch module.
    """
    B, T = idx.shape
    V, C = table.shape
    N = B * T

    tn, resident = _plan(N, V, C, tn, force_hbm_gather)
    assert N % tn == 0, "token count must be divisible by the row-tile size"
    num_tiles = N // tn
    compute_loss = targets is not None

    idx_flat = idx.reshape(N).astype(jnp.int32)       # scalar-prefetched to SMEM
    table = table.astype(jnp.float32)

    if resident:
        # Table DMA'd HBM->VMEM once, reused by every grid step.
        table_spec = pl.BlockSpec((V, C), lambda i, _idx: (0, 0))
    else:
        # Huge tables: stay in HBM, per-row DMA gather straight from HBM.
        table_spec = pl.BlockSpec(memory_space=pl.ANY)

    logits_spec = pl.BlockSpec((tn, C), lambda i, _idx: (i, 0))
    logits_shape = jax.ShapeDtypeStruct((N, C), jnp.float32)

    operands = [idx_flat]
    in_specs = []
    if compute_loss:
        operands.append(targets.reshape(N, 1).astype(jnp.int32))
        in_specs.append(pl.BlockSpec((tn, 1), lambda i, _idx: (i, 0)))
    operands.append(table)
    in_specs.append(table_spec)

    if compute_loss:
        kernel = _bigram_loss_kernel
        out_shape = (logits_shape,
                     jax.ShapeDtypeStruct((num_tiles,) + _LOSS_PAD, jnp.float32))
        out_specs = [logits_spec,
                     pl.BlockSpec((1,) + _LOSS_PAD, lambda i, _idx: (i, 0, 0))]
    else:
        kernel = _bigram_infer_kernel
        out_shape = logits_shape
        out_specs = logits_spec

    result = pl.pallas_call(
        kernel,
        out_shape=out_shape,
        grid_spec=pltpu.PrefetchScalarGridSpec(
            num_scalar_prefetch=1,                      # idx -> SMEM
            grid=(num_tiles,),
            in_specs=in_specs,
            out_specs=out_specs,
            scratch_shapes=[pltpu.SemaphoreType.DMA(())],   # one shared DMA sem
        ),
        compiler_params=pltpu.CompilerParams(
            # Each tile writes its own logits + loss blocks -> safe to shard
            # the grid across TensorCores (2 on v7x; no-op on v5e/v6e).
            dimension_semantics=("parallel",),
            vmem_limit_bytes=_VMEM_LIMIT_BYTES,
        ),
    )(*operands)

    if not compute_loss:
        return result.reshape(B, T, C), None
    logits, loss_parts = result
    loss = jnp.sum(loss_parts[:, 0, 0]) / jnp.float32(N)
    return logits, loss


if __name__ == "__main__":
    vocab_size = 128      # V == C, lane-aligned
    B, T = 2, 8           # N = B*T = 16

    key = jax.random.PRNGKey(0)
    k_table, k_idx, k_tgt = jax.random.split(key, 3)

    # nn.Embedding default init ~ N(0, 1)
    table = jax.random.normal(k_table, (vocab_size, vocab_size), dtype=jnp.float32)
    idx = jax.random.randint(k_idx, (B, T), 0, vocab_size, dtype=jnp.int32)
    targets = jax.random.randint(k_tgt, (B, T), 0, vocab_size, dtype=jnp.int32)

    # Fast path (VMEM-resident table), explicit tn=8 -> grid=(2,): exercises
    # multi-tile partial losses.
    logits, loss = bigram_forward(idx, targets, table, tn=8)
    # Fast path, default VMEM-aware tile size.
    logits_d, loss_d = bigram_forward(idx, targets, table)
    # Inference path (targets=None -> loss-free kernel, logits keep (B, T, C)).
    logits_inf, loss_inf = bigram_forward(idx, None, table)
    # HBM per-row-DMA fallback path, exercised explicitly for coverage.
    logits_h, loss_h = bigram_forward(idx, targets, table, tn=8,
                                      force_hbm_gather=True)
    jax.block_until_ready((logits, loss, logits_d, loss_d,
                           logits_inf, logits_h, loss_h))

    # Pure-JAX reference (same semantics as the PyTorch module).
    ref_logits = table[idx.reshape(-1)]                      # (N, C)
    lse = jax.nn.logsumexp(ref_logits, axis=-1)
    picked = jnp.take_along_axis(ref_logits, targets.reshape(-1, 1), axis=-1)[:, 0]
    ref_loss = jnp.mean(lse - picked)

    assert logits.shape == (B * T, vocab_size)
    assert jnp.allclose(logits, ref_logits, atol=1e-5, rtol=1e-5)
    assert jnp.allclose(loss, ref_loss, atol=1e-5, rtol=1e-5)
    assert jnp.allclose(logits_d, ref_logits, atol=1e-5, rtol=1e-5)
    assert jnp.allclose(loss_d, ref_loss, atol=1e-5, rtol=1e-5)
    assert loss_inf is None
    assert logits_inf.shape == (B, T, vocab_size)
    assert jnp.allclose(logits_inf.reshape(B * T, vocab_size), ref_logits,
                        atol=1e-5, rtol=1e-5)
    assert jnp.allclose(logits_h, ref_logits, atol=1e-5, rtol=1e-5)
    assert jnp.allclose(loss_h, ref_loss, atol=1e-5, rtol=1e-5)

    print("KERNEL_OK")
</pallas_src>

<mosaic_0001>
module attributes {stable_mosaic.version = 11 : i64} {
  func.func @_bigram_loss_kernel(%arg0: i32, %arg1: memref<16xi32, #tpu.memory_space<smem>>, %arg2: memref<8x1xi32, #tpu.memory_space<vmem>>, %arg3: memref<128x128xf32, #tpu.memory_space<vmem>>, %arg4: memref<8x128xf32, #tpu.memory_space<vmem>>, %arg5: memref<1x8x128xf32, #tpu.memory_space<vmem>>, %arg6: memref<!tpu.dma_semaphore, #tpu.memory_space<semaphore_mem>>) attributes {dimension_semantics = [#tpu.dimension_semantics<parallel>], iteration_bounds = array<i64: 2>, scalar_prefetch = 1 : i64, scratch_operands = 1 : i64, tpu.core_type = #tpu.core_type<tc>, window_params = [{transform_indices = @transform_0, window_bounds = array<i64: 8, 1>}, {pipeline_mode = #tpu.pipeline_mode<synchronous>, transform_indices = @transform_1, window_bounds = array<i64: 128, 128>}, {transform_indices = @transform_2, window_bounds = array<i64: 8, 128>}, {transform_indices = @transform_3, window_bounds = array<i64: 1, 8, 128>}]} {
    %c8_i32 = arith.constant 8 : i32
    %0 = arith.muli %arg0, %c8_i32 : i32
    %c0_i32 = arith.constant 0 : i32
    %c8_i32_0 = arith.constant 8 : i32
    %1 = arith.addi %c0_i32, %c8_i32_0 : i32
    %c1_i32 = arith.constant 1 : i32
    scf.for %arg7 = %c0_i32 to %1 step %c1_i32  : i32 {
      %c1_i32_15 = arith.constant 1 : i32
      %28 = arith.muli %arg7, %c1_i32_15 : i32
      %c0_i32_16 = arith.constant 0 : i32
      %29 = arith.addi %c0_i32_16, %28 : i32
      %30 = arith.addi %0, %29 : i32
      %31 = arith.index_cast %30 : i32 to index
      %32 = memref.load %arg1[%31] : memref<16xi32, #tpu.memory_space<smem>>
      %c0_i32_17 = arith.constant 0 : i32
      %33 = tpu.memref_slice %arg3[%32, %c0_i32_17] : memref<128x128xf32, #tpu.memory_space<vmem>> -> memref<1x128xf32, #tpu.memory_space<vmem>>
      %c0_i32_18 = arith.constant 0 : i32
      %34 = tpu.memref_slice %arg4[%29, %c0_i32_18] : memref<8x128xf32, #tpu.memory_space<vmem>> -> memref<1x128xf32, #tpu.memory_space<vmem>>
      tpu.enqueue_dma source(%33 : memref<1x128xf32, #tpu.memory_space<vmem>>) target(%34 : memref<1x128xf32, #tpu.memory_space<vmem>>) target_semaphore(%arg6 : memref<!tpu.dma_semaphore, #tpu.memory_space<semaphore_mem>>)
    }
    %c8_i32_1 = arith.constant 8 : i32
    %c0_i32_2 = arith.constant 0 : i32
    %c8_i32_3 = arith.constant 8 : i32
    %2 = arith.addi %c0_i32_2, %c8_i32_3 : i32
    %c1_i32_4 = arith.constant 1 : i32
    scf.for %arg7 = %c0_i32_2 to %2 step %c1_i32_4  : i32 {
      %c0_i32_15 = arith.constant 0 : i32
      %c0_i32_16 = arith.constant 0 : i32
      %28 = tpu.memref_slice %arg3[%c0_i32_15, %c0_i32_16] : memref<128x128xf32, #tpu.memory_space<vmem>> -> memref<1x128xf32, #tpu.memory_space<vmem>>
      %c0_i32_17 = arith.constant 0 : i32
      %c0_i32_18 = arith.constant 0 : i32
      %29 = tpu.memref_slice %arg4[%c0_i32_17, %c0_i32_18] : memref<8x128xf32, #tpu.memory_space<vmem>> -> memref<1x128xf32, #tpu.memory_space<vmem>>
      tpu.wait_dma2 semaphore(%arg6 : memref<!tpu.dma_semaphore, #tpu.memory_space<semaphore_mem>>) src(%28 : memref<1x128xf32, #tpu.memory_space<vmem>>) dst(%29 : memref<1x128xf32, #tpu.memory_space<vmem>>)
    }
    %c0 = arith.constant 0 : index
    %c0_5 = arith.constant 0 : index
    %3 = vector.load %arg4[%c0, %c0_5] : memref<8x128xf32, #tpu.memory_space<vmem>>, vector<8x128xf32>
    %c0_6 = arith.constant 0 : index
    %c0_7 = arith.constant 0 : index
    %4 = vector.load %arg2[%c0_6, %c0_7] : memref<8x1xi32, #tpu.memory_space<vmem>>, vector<8x1xi32>
    %5 = tpu.iota {dimensions = array<i32: 1>} : vector<8x128xi32>
    %cst = arith.constant dense<0xFF800000> : vector<8xf32>
    %6 = vector.multi_reduction <maximumf>, %3, %cst [1] : vector<8x128xf32> to vector<8xf32>
    %7 = vector.shape_cast %6 : vector<8xf32> to vector<8x1xf32>
    %8 = vector.broadcast %7 : vector<8x1xf32> to vector<8x128xf32>
    %9 = arith.subf %3, %8 : vector<8x128xf32>
    %10 = math.exp %9 : vector<8x128xf32>
    %cst_8 = arith.constant dense<0.000000e+00> : vector<8xf32>
    %11 = vector.multi_reduction <add>, %10, %cst_8 [1] : vector<8x128xf32> to vector<8xf32>
    %12 = vector.shape_cast %11 : vector<8xf32> to vector<8x1xf32>
    %13 = math.log %12 : vector<8x1xf32>
    %14 = arith.addf %13, %7 : vector<8x1xf32>
    %15 = vector.broadcast %4 : vector<8x1xi32> to vector<8x128xi32>
    %16 = arith.cmpi eq, %5, %15 : vector<8x128xi32>
    %cst_9 = arith.constant 0.000000e+00 : f32
    %17 = vector.broadcast %cst_9 : f32 to vector<8x128xf32>
    %18 = arith.select %16, %3, %17 : vector<8x128xi1>, vector<8x128xf32>
    %cst_10 = arith.constant dense<0.000000e+00> : vector<8xf32>
    %19 = vector.multi_reduction <add>, %18, %cst_10 [1] : vector<8x128xf32> to vector<8xf32>
    %20 = vector.shape_cast %19 : vector<8xf32> to vector<8x1xf32>
    %21 = arith.subf %14, %20 : vector<8x1xf32>
    %22 = vector.shape_cast %21 : vector<8x1xf32> to vector<1x8x1xf32>
    %cst_11 = arith.constant dense<0.000000e+00> : vector<1xf32>
    %23 = vector.multi_reduction <add>, %22, %cst_11 [1, 2] : vector<1x8x1xf32> to vector<1xf32>
    %24 = vector.shape_cast %23 : vector<1xf32> to vector<1x1x1xf32>
    %25 = vector.extract %24[0, 0, 0] : f32 from vector<1x1x1xf32>
    %26 = vector.broadcast %25 : f32 to vector<1x8x128xf32>
    %c0_12 = arith.constant 0 : index
    %c0_13 = arith.constant 0 : index
    %c0_14 = arith.constant 0 : index
    %27 = vector.load %arg5[%c0_12, %c0_13, %c0_14] : memref<1x8x128xf32, #tpu.memory_space<vmem>>, vector<1x8x128xf32>
    tpu.vector_store %arg5[%c0_12, %c0_13, %c0_14], %26 {strides = array<i32>} : memref<1x8x128xf32, #tpu.memory_space<vmem>>, vector<1x8x128xf32>,
    return
  }
  func.func @transform_0(%arg0: i32, %arg1: memref<16xi32, #tpu.memory_space<smem>>) -> (i32, i32) {
    %c0_i32 = arith.constant 0 : i32
    %c0_i32_0 = arith.constant 0 : i32
    return %arg0, %c0_i32 : i32, i32
  }
  func.func @transform_1(%arg0: i32, %arg1: memref<16xi32, #tpu.memory_space<smem>>) -> (i32, i32) {
    %c0_i32 = arith.constant 0 : i32
    %c0_i32_0 = arith.constant 0 : i32
    %c0_i32_1 = arith.constant 0 : i32
    return %c0_i32, %c0_i32_0 : i32, i32
  }
  func.func @transform_2(%arg0: i32, %arg1: memref<16xi32, #tpu.memory_space<smem>>) -> (i32, i32) {
    %c0_i32 = arith.constant 0 : i32
    %c0_i32_0 = arith.constant 0 : i32
    return %arg0, %c0_i32 : i32, i32
  }
  func.func @transform_3(%arg0: i32, %arg1: memref<16xi32, #tpu.memory_space<smem>>) -> (i32, i32, i32) {
    %c0_i32 = arith.constant 0 : i32
    %c0_i32_0 = arith.constant 0 : i32
    %c0_i32_1 = arith.constant 0 : i32
    return %arg0, %c0_i32, %c0_i32_0 : i32, i32, i32
  }
}

</mosaic_0001>

<llo_original>
// kernel: tpu_custom_call.1
$region0: #{tpu_custom_call.1}
  #allocation0 [shape = 'u32[]', space=smem, size = 0x4, offset = 0x4, fixed_abs, tag = 'smem constant byte address 0x4 - core index']
  #allocation1 [shape = 'u32[144,128]{1,0:T(1,128)}', space=vmem, size = 0x12000, scoped, tag = 'internal scratch']
  #allocation2 [shape = 's32[1]{0}', space=sflag, size = 0x4, scoped, tag = 'scratch operand']
  #allocation3 [shape = 's32[1]{0}', space=sflag, size = 0x4, scoped, tag = 'scoped memory for tpu_custom_call.1']
  #allocation4 [shape = 'u8[512]{0}', space=smem, size = 0x200, scoped, tag = 'prefetched SMEM operand 0']
  #allocation11 [shape = 's32[]', space=sflag, size = 0x4, offset = 0, fixed_abs, tag = 'sflag constant byte address 0x0 - dummy sync flag']
  %s0 = inlined_call_operand.vmem [shape: s32[16], index: 0, kind: input, shape index: {}]
  %s1 = inlined_call_operand.vmem [shape: s32[16,1], index: 1, kind: input, shape index: {}]
  %s2 = inlined_call_operand.hbm [shape: f32[128,128], index: 2, kind: input, shape index: {}]
  %s3 = inlined_call_operand.hbm [shape: f32[16,128], index: 3, kind: output, shape index: {0}]
  %s4 = inlined_call_operand.hbm [shape: f32[2,8,128], index: 4, kind: output, shape index: {1}]
  %5 = xla_tuple %s3, %s4
  %s6 = sld [smem:[#allocation0]]
  $region97: #{tpu_custom_call.1} parent=0
    _
  %s8 = ssub.s32 1, %s6
  %s9 = scalar_select 0, %s8, %s6
  %s10 = sshll.u32 %s0, 4
  %s11 = int_to_ptr.vmem [resolvable:$true] %s10
  %13 = dma.vmem_to_smem %s11, 16, [#allocation4], [#allocation3]
  %14 = dma.done [#allocation3], 16
  %15 = sfence
  $region1: #{tpu_custom_call.1} parent=0
    #allocation5 [shape = 'u8[65536]{0}', space=vmem, size = 0x10000, scoped, tag = 'input window, operand 2, single buffered']
    #allocation6 [shape = 's32[2]{0}', space=sflag, size = 0x8, scoped, tag = 'scoped memory for tpu_custom_call.1']
    #allocation7 [shape = 's32[2]{0}', space=sflag, size = 0x8, scoped, tag = 'scoped memory for tpu_custom_call.1']
    #allocation8 [shape = 'u8[8192]{0}', space=vmem, size = 0x2000, scoped, tag = 'output window, operand 0']
    #allocation9 [shape = 'u8[8192]{0}', space=vmem, size = 0x2000, scoped, tag = 'output window, operand 1']
    #allocation10 [shape = 's32[2]{0}', space=sflag, size = 0x8, scoped, tag = 'scoped memory for tpu_custom_call.1']
    %16 = vsyncpa [#allocation6], 0
    %17 = vsyncpa [#allocation7], 0
    %s18 = scalar_lea.sflag [#allocation7], 1
    %19 = vsyncpa %s18, 0
    %20 = vsyncpa [#allocation10], 0
    %s21 = scalar_lea.sflag [#allocation10], 1
    %22 = vsyncpa %s21, 0
    loop: start=0, step=1, limit=4
    $region2: #{tpu_custom_call.1} parent=1 // loop_pre_header
      _
    $region3: #{tpu_custom_call.1} parent=1 // loop_header
      %s24 = sphi 0, %s28
      %p25 = scmp.ge.s32.totalorder %s24, 4
      %s34 = sphi 0, %s36
      %s37 = sphi 0, %s34
      %s38 = sphi 0, %s37
      %s54 = sphi 0, %s38
      %s58 = sphi 0, %s58
      %s60 = sphi 0, %s58
      %s61 = sphi 0, %s60
      %s75 = sphi 0, %s61
      %s81 = sphi 0, %s83
      %s84 = sphi 0, %s81
      %s85 = sphi 0, %s84
      %s101 = sphi 0, %s85
      %s107 = sphi 0, %s109
      %s110 = sphi 0, %s107
      %s111 = sphi 0, %s110
      %s127 = sphi 0, %s111
    $region4: #{tpu_custom_call.1} parent=1 // loop_header_branch
      %27 = sbr.rel (%p25) target = $region8
    $region5: #{tpu_custom_call.1} parent=1 // loop_body
      %s29 = ssub.s32 %s24, 1
      %s30 = ssub.s32 %s24, 2
      %s31 = sadd.s32 %s24, 1
      %s32 = ssub.s32 %s24, %s31
      %p33 = scmp.eq.s32.totalorder %s32, 0
      %s35 = sadd.s32 %s34, 1
      %s36 = scalar_select %p33, %s34, %s35
      %p39 = pneg %p33
      %p40 = scmp.eq.s32.totalorder %s24, 1
      %p41 = por %p39, %p40
      %p42 = scmp.ne.s32.totalorder %s34, %s37
      %p43 = scmp.eq.s32.totalorder %s24, 0
      %p44 = por %p42, %p43
      %p45 = scmp.ne.s32.totalorder %s34, %s37
      %p46 = scmp.eq.s32.totalorder %s29, 1
      %p47 = por %p45, %p46
      %p48 = scmp.ne.s32.totalorder %s37, %s38
      %p49 = scmp.eq.s32.totalorder %s29, 0
      %p50 = por %p48, %p49
      %p51 = scmp.ne.s32.totalorder %s37, %s38
      %p52 = scmp.eq.s32.totalorder %s30, 1
      %p53 = por %p51, %p52
      %p55 = scmp.ne.s32.totalorder %s38, %s54
      %p56 = scmp.eq.s32.totalorder %s30, 0
      %p57 = por %p55, %p56
      %s59 = sadd.s32 %s58, 1
      %p62 = scmp.eq.s32.totalorder %s24, 1
      %p63 = scmp.ne.s32.totalorder %s58, %s60
      %p64 = scmp.eq.s32.totalorder %s24, 0
      %p65 = por %p63, %p64
      %p66 = scmp.ne.s32.totalorder %s58, %s60
      %p67 = scmp.eq.s32.totalorder %s29, 1
      %p68 = por %p66, %p67
      %p69 = scmp.ne.s32.totalorder %s60, %s61
      %p70 = scmp.eq.s32.totalorder %s29, 0
      %p71 = por %p69, %p70
      %p72 = scmp.ne.s32.totalorder %s60, %s61
      %p73 = scmp.eq.s32.totalorder %s30, 1
      %p74 = por %p72, %p73
      %p76 = scmp.ne.s32.totalorder %s61, %s75
      %p77 = scmp.eq.s32.totalorder %s30, 0
      %p78 = por %p76, %p77
      %s79 = ssub.s32 %s24, %s31
      %p80 = scmp.eq.s32.totalorder %s79, 0
      %s82 = sadd.s32 %s81, 1
      %s83 = scalar_select %p80, %s81, %s82
      %p86 = pneg %p80
      %p87 = scmp.eq.s32.totalorder %s24, 1
      %p88 = por %p86, %p87
      %p89 = scmp.ne.s32.totalorder %s81, %s84
      %p90 = scmp.eq.s32.totalorder %s24, 0
      %p91 = por %p89, %p90
      %p92 = scmp.ne.s32.totalorder %s81, %s84
      %p93 = scmp.eq.s32.totalorder %s29, 1
      %p94 = por %p92, %p93
      %p95 = scmp.ne.s32.totalorder %s84, %s85
      %p96 = scmp.eq.s32.totalorder %s29, 0
      %p97 = por %p95, %p96
      %p98 = scmp.ne.s32.totalorder %s84, %s85
      %p99 = scmp.eq.s32.totalorder %s30, 1
      %p100 = por %p98, %p99
      %p102 = scmp.ne.s32.totalorder %s85, %s101
      %p103 = scmp.eq.s32.totalorder %s30, 0
      %p104 = por %p102, %p103
      %s105 = ssub.s32 %s24, %s31
      %p106 = scmp.eq.s32.totalorder %s105, 0
      %s108 = sadd.s32 %s107, 1
      %s109 = scalar_select %p106, %s107, %s108
      %p112 = pneg %p106
      %p113 = scmp.eq.s32.totalorder %s24, 1
      %p114 = por %p112, %p113
      %p115 = scmp.ne.s32.totalorder %s107, %s110
      %p116 = scmp.eq.s32.totalorder %s24, 0
      %p117 = por %p115, %p116
      %p118 = scmp.ne.s32.totalorder %s107, %s110
      %p119 = scmp.eq.s32.totalorder %s29, 1
      %p120 = por %p118, %p119
      %p121 = scmp.ne.s32.totalorder %s110, %s111
      %p122 = scmp.eq.s32.totalorder %s29, 0
      %p123 = por %p121, %p122
      %p124 = scmp.ne.s32.totalorder %s110, %s111
      %p125 = scmp.eq.s32.totalorder %s30, 1
      %p126 = por %p124, %p125
      %p128 = scmp.ne.s32.totalorder %s111, %s127
      %p129 = scmp.eq.s32.totalorder %s30, 0
      %p130 = por %p128, %p129
      %p131 = scmp.le.s32.totalorder 1, %s24
      %p132 = scmp.lt.s32.totalorder %s24, 3
      %p133 = pnand %p131, %p132
      %p134 = pneg %p133
      // Predicated region
      $region9: #{tpu_custom_call.1} parent=5 // pred_check
        _
      $region10: #{tpu_custom_call.1} parent=5 // pred_check_branch
        %136 = sbr.rel (%p133) target = $region12
      $region11: #{tpu_custom_call.1} parent=5 // pred_region
        %s137 = ssub.s32 %s24, 1
        // Predicated region
        $region13: #{tpu_custom_call.1} parent=11 // pred_check
          %p138 = pneg %p71
        $region14: #{tpu_custom_call.1} parent=11 // pred_check_branch
          %140 = sbr.rel (%p138) target = $region16
        $region15: #{tpu_custom_call.1} parent=11 // pred_region
          %s142 = ssub.s32 2048, 2048
          %143 = vsyncadd [#allocation6], %s142
          %s144 = sshll.u32 [#allocation5], 4
          %s145 = int_to_ptr.vmem [resolvable:$true] %s144
          %150 = dma.hbm_to_vmem [thread:$0]  %s2, 2048, %s145, [#allocation6], 128, 128, 8
        $region16: #{tpu_custom_call.1} parent=11 // pred_fallthru
          _
      $region12: #{tpu_custom_call.1} parent=5 // pred_fallthru
        _
      %p151 = scmp.lt.s32.totalorder %s24, 2
      // Predicated region
      $region17: #{tpu_custom_call.1} parent=5 // pred_check
        %p152 = pneg %p151
      $region18: #{tpu_custom_call.1} parent=5 // pred_check_branch
        %154 = sbr.rel (%p152) target = $region20
      $region19: #{tpu_custom_call.1} parent=5 // pred_region
        // Predicated region
        $region21: #{tpu_custom_call.1} parent=19 // pred_check
          %p155 = pneg %p44
        $region22: #{tpu_custom_call.1} parent=19 // pred_check_branch
          %157 = sbr.rel (%p155) target = $region24
        $region23: #{tpu_custom_call.1} parent=19 // pred_region
          %p158 = scmp.lt.s32.totalorder %s24, 1
          %s159 = scalar_select %p158, %s24, 1
          %s160 = smul.addr %s159, 8
          %s161 = scalar_lea.vmem %s1, %s160
        $region24: #{tpu_custom_call.1} parent=19 // pred_fallthru
          _
      $region20: #{tpu_custom_call.1} parent=5 // pred_fallthru
        _
      %p162 = scmp.le.s32.totalorder 1, %s24
      %p163 = scmp.lt.s32.totalorder %s24, 3
      %p164 = pnand %p162, %p163
      %p165 = pneg %p164
      // Predicated region
      $region25: #{tpu_custom_call.1} parent=5 // pred_check
        _
      $region26: #{tpu_custom_call.1} parent=5 // pred_check_branch
        %167 = sbr.rel (%p164) target = $region28
      $region27: #{tpu_custom_call.1} parent=5 // pred_region
        %s168 = ssub.s32 %s24, 1
        // Predicated region
        $region29: #{tpu_custom_call.1} parent=27 // pred_check
          %p169 = pneg %p71
        $region30: #{tpu_custom_call.1} parent=27 // pred_check_branch
          %171 = sbr.rel (%p169) target = $region32
        $region31: #{tpu_custom_call.1} parent=27 // pred_region
          %172 = dma.done [#allocation6], 2048
        $region32: #{tpu_custom_call.1} parent=27 // pred_fallthru
          _
        %p173 = scmp.lt.s32.totalorder %s29, 1
        %s174 = scalar_select %p173, %s29, 1
        %s175 = smul.addr %s174, 8
        %s176 = scalar_lea.vmem %s1, %s175
        %p177 = pneg %p50
        %p178 = pneg %p47
        %p179 = pneg %p71
        %p180 = pneg %p68
        %p181 = pneg %p97
        %p182 = pneg %p94
        %s183 = sand.u32 %s84, 1
        %s184 = scalar_lea.sflag [#allocation7], %s183
        %s185 = sand.u32 %s84, 1
        %s186 = smul.addr %s185, 8
        %s187 = scalar_lea.vmem [#allocation8], %s186
        %p188 = pneg %p123
        %p189 = pneg %p120
        %s190 = sand.u32 %s110, 1
        %s191 = scalar_lea.sflag [#allocation10], %s190
        %s192 = sand.u32 %s110, 1
        %s193 = smul.addr %s192, 8
        %s194 = scalar_lea.vmem [#allocation9], %s193
        %p195 = scmp.lt.s32.totalorder %s29, 1
        %s196 = scalar_select %p195, %s29, 1
        %s197 = smul.addr %s196, 8
        %s198 = scalar_lea.vmem %s1, %s197
        %s199 = smul.u32 %s29, 8
        loop: start=0, step=1, limit=8
        $region33: #{tpu_custom_call.1} parent=27 // loop_pre_header
          _
        $region34: #{tpu_custom_call.1} parent=27 // loop_header
          %s201 = sphi 0, %s205
          %p202 = scmp.ge.s32.totalorder %s201, 8
        $region35: #{tpu_custom_call.1} parent=27 // loop_header_branch
          %204 = sbr.rel (%p202) target = $region39
        $region36: #{tpu_custom_call.1} parent=27 // loop_body
          %s206 = sadd.s32 %s199, %s201
          %s207 = sld [smem:[#allocation4 + %s206]]
          %s208 = scalar_lea.vmem [#allocation5], %s207
          %s209 = scalar_lea.vmem %s187, %s201 [#allocation8]
          %p211 = scmp.lt.u32.totalorder 1, 8
          %p212 = pneg %p211
          // Predicated region
          $region40: #{tpu_custom_call.1} parent=36 // pred_check
            _
          $region41: #{tpu_custom_call.1} parent=36 // pred_check_branch
            %214 = sbr.rel (%p211) target = $region43
          $region42: #{tpu_custom_call.1} parent=36 // pred_region
            %s230 = sand.u32 1, 7
            %p231 = scmp.eq.s32.totalorder %s230, 0
            %p232 = pneg %p231
            // Predicated region
            $region55: #{tpu_custom_call.1} parent=42 // pred_check
              _
            $region56: #{tpu_custom_call.1} parent=42 // pred_check_branch
              %234 = sbr.rel (%p231) target = $region58
            $region57: #{tpu_custom_call.1} parent=42 // pred_region
              %s235 = sand.u32 1, 7
              %s236 = ssub.s32 1, %s235
              %s237 = scalar_lea.vmem %s208, %s236 [#allocation5]
              %s238 = ssub.s32 1, %s235
              %s239 = scalar_lea.vmem %s209, %s238 [#allocation8]
              %s240 = sshll.u32 1, %s235
              %s241 = ssub.s32 %s240, 1
              loop: start=0, step=1, limit=1
              $region59: #{tpu_custom_call.1} parent=57 // loop_pre_header
                _
              $region60: #{tpu_custom_call.1} parent=57 // loop_header
                %s243 = sphi 0, %s247
                %p244 = scmp.ge.s32.totalorder %s243, 1
                %s248 = sphi %s237, %s237
                %s249 = sphi %s239, %s239
              $region61: #{tpu_custom_call.1} parent=57 // loop_header_branch
                %246 = sbr.rel (%p244) target = $region65
              $region62: #{tpu_custom_call.1} parent=57 // loop_body
                %v250 = vld [vmem:[%s248] sm:%s241]
                %251 = vst [vmem:[%s249] sm:%s241] %v250
              $region63: #{tpu_custom_call.1} parent=57 // loop_footer
                %s247 = sadd.s32 1, %s243
              $region64: #{tpu_custom_call.1} parent=57 // loop_footer_branch
                %242 = sbr.rel target = $region60
              $region65: #{tpu_custom_call.1} parent=57 // loop_exit
                _
            $region58: #{tpu_custom_call.1} parent=42 // pred_fallthru
              _
          $region43: #{tpu_custom_call.1} parent=36 // pred_fallthru
            _
          // Predicated region
          $region44: #{tpu_custom_call.1} parent=36 // pred_check
            %p215 = pneg %p211
          $region45: #{tpu_custom_call.1} parent=36 // pred_check_branch
            %217 = sbr.rel (%p215) target = $region47
          $region46: #{tpu_custom_call.1} parent=36 // pred_region
            %s218 = sshll.u32 1, 1
            %s219 = ssub.s32 %s218, 1
            loop: start=0, step=1, limit=1
            $region48: #{tpu_custom_call.1} parent=46 // loop_pre_header
              _
            $region49: #{tpu_custom_call.1} parent=46 // loop_header
              %s221 = sphi 0, %s225
              %p222 = scmp.ge.s32.totalorder %s221, 1
              %s226 = sphi %s208, %s208
              %s227 = sphi %s209, %s209
            $region50: #{tpu_custom_call.1} parent=46 // loop_header_branch
              %224 = sbr.rel (%p222) target = $region54
            $region51: #{tpu_custom_call.1} parent=46 // loop_body
              %v228 = vld [vmem:[%s226] sm:%s219]
              %229 = vst [vmem:[%s227] sm:%s219] %v228
            $region52: #{tpu_custom_call.1} parent=46 // loop_footer
              %s225 = sadd.s32 1, %s221
            $region53: #{tpu_custom_call.1} parent=46 // loop_footer_branch
              %220 = sbr.rel target = $region49
            $region54: #{tpu_custom_call.1} parent=46 // loop_exit
              _
          $region47: #{tpu_custom_call.1} parent=36 // pred_fallthru
            _
          // Predicated region
          $region66: #{tpu_custom_call.1} parent=36 // pred_check
            _
          $region67: #{tpu_custom_call.1} parent=36 // pred_check_branch
            %254 = sbr.rel (0) target = $region69
          $region68: #{tpu_custom_call.1} parent=36 // pred_region
            %255 = vsyncadd [#allocation2], 16
          $region69: #{tpu_custom_call.1} parent=36 // pred_fallthru
            _
        $region37: #{tpu_custom_call.1} parent=27 // loop_footer
          %s205 = sadd.s32 1, %s201
        $region38: #{tpu_custom_call.1} parent=27 // loop_footer_branch
          %200 = sbr.rel target = $region34
        $region39: #{tpu_custom_call.1} parent=27 // loop_exit
          _
        loop: start=0, step=1, limit=8
        $region70: #{tpu_custom_call.1} parent=27 // loop_pre_header
          _
        $region71: #{tpu_custom_call.1} parent=27 // loop_header
          %s257 = sphi 0, %s261
          %p258 = scmp.ge.s32.totalorder %s257, 8
        $region72: #{tpu_custom_call.1} parent=27 // loop_header_branch
          %260 = sbr.rel (%p258) target = $region76
        $region73: #{tpu_custom_call.1} parent=27 // loop_body
          %s262 = smul.u32 1, 1
          %s263 = sshll.u32 %s262, 4
          %264 = dma.done [#allocation2], %s263
        $region74: #{tpu_custom_call.1} parent=27 // loop_footer
          %s261 = sadd.s32 1, %s257
        $region75: #{tpu_custom_call.1} parent=27 // loop_footer_branch
          %256 = sbr.rel target = $region71
        $region76: #{tpu_custom_call.1} parent=27 // loop_exit
          _
        %v265 = vld [vmem:[%s187] sm:$0xff]
        %v266 = vld [vmem:[%s198] sm:$0xff]
        %v267 = vlaneseq
        %v268 = vand.u32 %v267, 127
        %269 = vmax.xlane.f32.xlu0 %v265
        %v270 = vpop.xlane.xlu0 %269
        %v271 = vsub.f32 %v265, %v270
        %v272 = vmul.f32 %v271, 1.442695
        %v273 = vpow.pop %v272
        %274 = vadd.xlane.f32.xlu0 %v273
        %v275 = vpop.xlane.xlu0 %274
        %v276 = vlog2.pop %v275
        %v277 = vmul.f32 %v276, 0.6931472
        %v278 = vadd.f32 %v277, %v270
        %279 = vset.pattern.permute.xlu0 0
        %280 = vperm.xlu0 %279, %v266
        %v281 = vpop.permute.xlu0 %280
        %vm282 = vcmp.eq.s32.totalorder %v268, %v281
        %v283 = vsel %vm282, %v265, 0.0
        %284 = vadd.xlane.f32.xlu0 %v283
        %v285 = vpop.xlane.xlu0 %284
        %v286 = vsub.f32 %v278, %v285
        %vm287 = vcmask 7168
        %v288 = vsel %vm287, %v286, 0.0
        %289 = vadd.xlane.f32.xlu0 %v288
        %v290 = vpop.xlane.xlu0 %289
        %v291 = vrot.slane %v290, 4
        %v292 = vadd.f32 %v290, %v291
        %v293 = vrot.slane %v292, 2
        %v294 = vadd.f32 %v292, %v293
        %v295 = vrot.slane %v294, 1
        %v296 = vadd.f32 %v294, %v295
        %s297 = vtos %v296
        %v298 = vstv %s297
        %299 = vst [vmem:[%s194] sm:$0xff] %v298
        %s300 = sand.u32 %s84, 1
        %s301 = scalar_lea.sflag [#allocation7], %s300
        %s302 = sand.u32 %s84, 1
        %s303 = smul.addr %s302, 8
        %s304 = scalar_lea.vmem [#allocation8], %s303
        %s305 = sand.u32 %s110, 1
        %s306 = scalar_lea.sflag [#allocation10], %s305
        %s307 = sand.u32 %s110, 1
        %s308 = smul.addr %s307, 8
        %s309 = scalar_lea.vmem [#allocation9], %s308
        // Predicated region
        $region77: #{tpu_custom_call.1} parent=27 // pred_check
          %p310 = pneg %p94
        $region78: #{tpu_custom_call.1} parent=27 // pred_check_branch
          %312 = sbr.rel (%p310) target = $region80
        $region79: #{tpu_custom_call.1} parent=27 // pred_region
          %s314 = ssub.s32 128, 128
          %315 = vsyncadd %s301, %s314
          %s316 = smul.addr %s29, 128
          %s317 = scalar_lea.hbm %s3, %s316
          %s319 = sshll.u32 %s304, 4
          %s320 = int_to_ptr.vmem [resolvable:$true] %s319
          %322 = dma.vmem_to_hbm [thread:$0]  %s320, 128, %s317, %s301
        $region80: #{tpu_custom_call.1} parent=27 // pred_fallthru
          _
        // Predicated region
        $region81: #{tpu_custom_call.1} parent=27 // pred_check
          %p323 = pneg %p120
        $region82: #{tpu_custom_call.1} parent=27 // pred_check_branch
          %325 = sbr.rel (%p323) target = $region84
        $region83: #{tpu_custom_call.1} parent=27 // pred_region
          %s327 = ssub.s32 128, 128
          %328 = vsyncadd %s306, %s327
          %s329 = smul.addr %s29, 128
          %s330 = scalar_lea.hbm %s4, %s329
          %s332 = sshll.u32 %s309, 4
          %s333 = int_to_ptr.vmem [resolvable:$true] %s332
          %335 = dma.vmem_to_hbm [thread:$0]  %s333, 128, %s330, %s306
        $region84: #{tpu_custom_call.1} parent=27 // pred_fallthru
          _
      $region28: #{tpu_custom_call.1} parent=5 // pred_fallthru
        _
      %p336 = scmp.le.s32.totalorder 2, %s24
      // Predicated region
      $region85: #{tpu_custom_call.1} parent=5 // pred_check
        %p337 = pneg %p336
      $region86: #{tpu_custom_call.1} parent=5 // pred_check_branch
        %339 = sbr.rel (%p337) target = $region88
      $region87: #{tpu_custom_call.1} parent=5 // pred_region
        %s340 = ssub.s32 %s24, 2
        // Predicated region
        $region89: #{tpu_custom_call.1} parent=87 // pred_check
          %p341 = pneg %p100
        $region90: #{tpu_custom_call.1} parent=87 // pred_check_branch
          %343 = sbr.rel (%p341) target = $region92
        $region91: #{tpu_custom_call.1} parent=87 // pred_region
          %s344 = sand.u32 %s85, 1
          %s345 = scalar_lea.sflag [#allocation7], %s344
          %s346 = sand.u32 %s85, 1
          %s347 = smul.addr %s346, 8
          %s348 = scalar_lea.vmem [#allocation8], %s347
          %349 = dma.done %s345, 128
        $region92: #{tpu_custom_call.1} parent=87 // pred_fallthru
          _
        // Predicated region
        $region93: #{tpu_custom_call.1} parent=87 // pred_check
          %p350 = pneg %p126
        $region94: #{tpu_custom_call.1} parent=87 // pred_check_branch
          %352 = sbr.rel (%p350) target = $region96
        $region95: #{tpu_custom_call.1} parent=87 // pred_region
          %s353 = sand.u32 %s111, 1
          %s354 = scalar_lea.sflag [#allocation10], %s353
          %s355 = sand.u32 %s111, 1
          %s356 = smul.addr %s355, 8
          %s357 = scalar_lea.vmem [#allocation9], %s356
          %358 = dma.done %s354, 128
        $region96: #{tpu_custom_call.1} parent=87 // pred_fallthru
          _
      $region88: #{tpu_custom_call.1} parent=5 // pred_fallthru
        _
    $region6: #{tpu_custom_call.1} parent=1 // loop_footer
      %s28 = sadd.s32 1, %s24
    $region7: #{tpu_custom_call.1} parent=1 // loop_footer_branch
      %23 = sbr.rel target = $region3
    $region8: #{tpu_custom_call.1} parent=1 // loop_exit
      _
    %359 = vsyncpa [#allocation6], 1
    %s360 = scalar_lea.sflag [#allocation6], 1
    %361 = vsyncpa %s360, 1
    %362 = vsyncpa [#allocation7], 1
    %s363 = scalar_lea.sflag [#allocation7], 1
    %364 = vsyncpa %s363, 1
    %365 = vsyncpa [#allocation10], 1
    %s366 = scalar_lea.sflag [#allocation10], 1
    %367 = vsyncpa %s366, 1
  %368 = vsyncmov [#allocation2]
  %s369 = vpop.sfrf %368
  %p370 = scmp.eq.s32.totalorder %s369, 0
  %p371 = pneg %p370
  %373 = shalt.err (%p371)

</llo_original>
